<compile_context>
chip_gen: v6e
topology: v6e:2x2x1
jax: 0.10.0
libtpu: 0.0.40
codegen_flags: <defaults>
</compile_context>

<pallas_src>
import functools

import jax
import jax.numpy as jnp
from jax import lax
from jax.experimental import pallas as pl
from jax.experimental.pallas import tpu as pltpu

ALPHA = 1.0
GAMMA = 2.0          # specialized: (1 - pt) ** 2 == (1 - pt) * (1 - pt)
_LANES = 128
_SUBLANES = 8


def _focal_loss_kernel(logits_ref, targets_ref, out_ref, *, n_valid, tile_n):
    """One grid step: focal-loss partial sum over `tile_n` rows."""
    x_raw = logits_ref[...]                       # (tile_n, C), input dtype
    tgt = targets_ref[...]                        # (tile_n, 1), int32
    tn, c = x_raw.shape

    # numerically stable log-sum-exp over the class (lane) dimension, in f32
    x = x_raw.astype(jnp.float32)
    m = jnp.max(x, axis=-1, keepdims=True)                         # (tn, 1)
    lse = m + jnp.log(jnp.sum(jnp.exp(x - m), axis=-1, keepdims=True))

    # target-class logit gather: select in the *input* dtype (exact — exactly
    # one nonzero per row), lane-sum, then cast the (tn, 1) result to f32.
    col_ids = lax.broadcasted_iota(jnp.int32, (tn, c), 1)
    picked = jnp.where(col_ids == tgt, x_raw, jnp.zeros((), x_raw.dtype))
    target_logit = jnp.sum(picked, axis=-1, keepdims=True).astype(jnp.float32)

    ce = lse - target_logit                                         # per-row CE
    pt = jnp.exp(-ce)
    one_m_pt = 1.0 - pt
    focal = (ALPHA * ce) * (one_m_pt * one_m_pt)                    # gamma == 2

    # Rows >= n_valid only exist because the last block extends past N (Pallas
    # reads garbage there); select them to exactly 0 before the reduction.
    row_ids = lax.broadcasted_iota(jnp.int32, (tn, 1), 0) + pl.program_id(0) * tile_n
    focal = jnp.where(row_ids < n_valid, focal, 0.0)

    # per-tile partial sum as one lane-dense (1, 1, 128) store
    out_ref[...] = jnp.broadcast_to(jnp.sum(focal), (1, 1, _LANES))


def focal_loss(logits, targets):
    """logits: (N, C) float (f32 or bf16), targets: (N,) int class indices.

    Matches FocalLoss(alpha=1, gamma=2, reduction='mean').forward.
    Assumes targets are in-range [0, C) (same as torch's gather requirement).
    """
    n, c = logits.shape
    dtype = logits.dtype
    itemsize = jnp.dtype(dtype).itemsize

    # sublane packing: f32 -> 8 rows / vreg, bf16 -> 16, 8-bit -> 32
    row_align = max(_SUBLANES, 32 // itemsize)
    # lanes actually materialized per row (for VMEM budgeting only)
    c_lanes = pl.cdiv(c, _LANES) * _LANES

    # ~4 MiB (f32-equivalent) logits tile: amortizes the ~0.35 us per-step
    # overhead on every generation while double-buffered input + f32
    # temporaries stay well inside the 48 MiB limit requested below
    # (and therefore inside v7x's 64 MiB physical VMEM).
    budget_bytes = 4 * 1024 * 1024
    max_rows = budget_bytes // max(1, c_lanes * 4)
    max_rows = max(row_align, min(8192, (max_rows // row_align) * row_align))

    if n <= max_rows:
        if n > 2 * row_align:
            # split medium problems into >= 2 grid steps so both TensorCores
            # of a v7x chip (megacore) get work
            tile_n = pl.cdiv(pl.cdiv(n, 2), row_align) * row_align
        else:
            tile_n = n        # block dim == full array dim: always legal
    else:
        tile_n = max_rows
    num_tiles = pl.cdiv(n, tile_n)

    targets2d = targets.astype(jnp.int32).reshape(n, 1)   # tiny (4 bytes/row)

    kernel = functools.partial(_focal_loss_kernel, n_valid=n, tile_n=tile_n)

    partials = pl.pallas_call(
        kernel,
        out_shape=jax.ShapeDtypeStruct((num_tiles, 1, _LANES), jnp.float32),
        grid=(num_tiles,),
        in_specs=[
            # last dim = full C (no class padding, no wrapper copy)
            pl.BlockSpec((tile_n, c), lambda i: (i, 0)),
            pl.BlockSpec((tile_n, 1), lambda i: (i, 0)),
        ],
        out_specs=pl.BlockSpec((1, 1, _LANES), lambda i: (i, 0, 0)),
        compiler_params=pltpu.CompilerParams(
            dimension_semantics=("parallel",),
            vmem_limit_bytes=48 * 1024 * 1024,
        ),
    )(logits, targets2d)

    # tiny cross-tile reduction + mean, once, outside the kernel
    # (f32 is plenty here: num_tiles partials, each already a tile-level sum)
    return jnp.sum(partials[:, 0, 0]) * (1.0 / n)


def _focal_loss_ref(logits, targets):
    # pure-JAX reference matching torch semantics
    logz = jax.nn.log_softmax(logits.astype(jnp.float32), axis=-1)
    ce = -jnp.take_along_axis(logz, targets[:, None].astype(jnp.int32), axis=-1)[:, 0]
    pt = jnp.exp(-ce)
    return jnp.mean(ALPHA * (1.0 - pt) ** GAMMA * ce)


if __name__ == "__main__":
    key = jax.random.PRNGKey(0)
    k1, k2, k3, k4, k5, k6 = jax.random.split(key, 6)

    # primary small test (N=8 samples, C=32 classes)
    N, C = 8, 32
    logits = jax.random.normal(k1, (N, C), dtype=jnp.float32)
    targets = jax.random.randint(k2, (N,), 0, C, dtype=jnp.int32)
    loss = focal_loss(logits, targets)
    jax.block_until_ready(loss)
    ref = _focal_loss_ref(logits, targets)
    assert jnp.allclose(loss, ref, atol=1e-5, rtol=1e-5), (loss, ref)

    # ragged N & C, multi-tile grid with a partial (garbage-padded) last block
    N2, C2 = 100, 7
    logits2 = jax.random.normal(k3, (N2, C2), dtype=jnp.float32)
    targets2 = jax.random.randint(k4, (N2,), 0, C2, dtype=jnp.int32)
    loss2 = focal_loss(logits2, targets2)
    jax.block_until_ready(loss2)
    ref2 = _focal_loss_ref(logits2, targets2)
    assert jnp.allclose(loss2, ref2, atol=1e-5, rtol=1e-5), (loss2, ref2)

    # bf16 logits (exercises packed-dtype path + input-dtype gather)
    N3, C3 = 24, 16
    logits3 = jax.random.normal(k5, (N3, C3), dtype=jnp.float32).astype(jnp.bfloat16)
    targets3 = jax.random.randint(k6, (N3,), 0, C3, dtype=jnp.int32)
    loss3 = focal_loss(logits3, targets3)
    jax.block_until_ready(loss3)
    ref3 = _focal_loss_ref(logits3, targets3)
    assert jnp.allclose(loss3, ref3, atol=2e-3, rtol=2e-3), (loss3, ref3)

    print("KERNEL_OK")
</pallas_src>

<mosaic_0001>
module attributes {stable_mosaic.version = 11 : i64} {
  func.func @_focal_loss_kernel(%arg0: i32, %arg1: memref<8x32xf32, #tpu.memory_space<vmem>>, %arg2: memref<8x1xi32, #tpu.memory_space<vmem>>, %arg3: memref<1x1x128xf32, #tpu.memory_space<vmem>>) attributes {dimension_semantics = [#tpu.dimension_semantics<parallel>], iteration_bounds = array<i64: 1>, scalar_prefetch = 0 : i64, scratch_operands = 0 : i64, tpu.core_type = #tpu.core_type<tc>, window_params = [{transform_indices = @transform_0, window_bounds = array<i64: 8, 32>}, {transform_indices = @transform_1, window_bounds = array<i64: 8, 1>}, {transform_indices = @transform_2, window_bounds = array<i64: 1, 1, 128>}]} {
    %c0 = arith.constant 0 : index
    %c0_0 = arith.constant 0 : index
    %0 = vector.load %arg1[%c0, %c0_0] : memref<8x32xf32, #tpu.memory_space<vmem>>, vector<8x32xf32>
    %c0_1 = arith.constant 0 : index
    %c0_2 = arith.constant 0 : index
    %1 = vector.load %arg2[%c0_1, %c0_2] : memref<8x1xi32, #tpu.memory_space<vmem>>, vector<8x1xi32>
    %cst = arith.constant dense<0xFF800000> : vector<8xf32>
    %2 = vector.multi_reduction <maximumf>, %0, %cst [1] : vector<8x32xf32> to vector<8xf32>
    %3 = vector.shape_cast %2 : vector<8xf32> to vector<8x1xf32>
    %4 = vector.broadcast %3 : vector<8x1xf32> to vector<8x32xf32>
    %5 = arith.subf %0, %4 : vector<8x32xf32>
    %6 = math.exp %5 : vector<8x32xf32>
    %cst_3 = arith.constant dense<0.000000e+00> : vector<8xf32>
    %7 = vector.multi_reduction <add>, %6, %cst_3 [1] : vector<8x32xf32> to vector<8xf32>
    %8 = vector.shape_cast %7 : vector<8xf32> to vector<8x1xf32>
    %9 = math.log %8 : vector<8x1xf32>
    %10 = arith.addf %3, %9 : vector<8x1xf32>
    %11 = tpu.iota {dimensions = array<i32: 1>} : vector<8x32xi32>
    %12 = vector.broadcast %1 : vector<8x1xi32> to vector<8x32xi32>
    %13 = arith.cmpi eq, %11, %12 : vector<8x32xi32>
    %cst_4 = arith.constant 0.000000e+00 : f32
    %14 = vector.broadcast %cst_4 : f32 to vector<8x32xf32>
    %15 = arith.select %13, %0, %14 : vector<8x32xi1>, vector<8x32xf32>
    %cst_5 = arith.constant dense<0.000000e+00> : vector<8xf32>
    %16 = vector.multi_reduction <add>, %15, %cst_5 [1] : vector<8x32xf32> to vector<8xf32>
    %17 = vector.shape_cast %16 : vector<8xf32> to vector<8x1xf32>
    %18 = arith.subf %10, %17 : vector<8x1xf32>
    %cst_6 = arith.constant 0.000000e+00 : f32
    %19 = vector.broadcast %cst_6 : f32 to vector<8x1xf32>
    %20 = arith.subf %19, %18 : vector<8x1xf32>
    %21 = math.exp %20 : vector<8x1xf32>
    %cst_7 = arith.constant 1.000000e+00 : f32
    %22 = vector.broadcast %cst_7 : f32 to vector<8x1xf32>
    %23 = arith.subf %22, %21 : vector<8x1xf32>
    %cst_8 = arith.constant 1.000000e+00 : f32
    %24 = vector.broadcast %cst_8 : f32 to vector<8x1xf32>
    %25 = arith.mulf %24, %18 : vector<8x1xf32>
    %26 = arith.mulf %23, %23 : vector<8x1xf32>
    %27 = arith.mulf %25, %26 : vector<8x1xf32>
    %28 = tpu.iota {dimensions = array<i32: 0>} : vector<8x1xi32>
    %c8_i32 = arith.constant 8 : i32
    %29 = arith.muli %arg0, %c8_i32 : i32
    %30 = vector.broadcast %29 : i32 to vector<8x1xi32>
    %31 = arith.addi %28, %30 : vector<8x1xi32>
    %c8_i32_9 = arith.constant 8 : i32
    %32 = vector.broadcast %c8_i32_9 : i32 to vector<8x1xi32>
    %33 = arith.cmpi slt, %31, %32 : vector<8x1xi32>
    %cst_10 = arith.constant 0.000000e+00 : f32
    %34 = vector.broadcast %cst_10 : f32 to vector<8x1xf32>
    %35 = arith.select %33, %27, %34 : vector<8x1xi1>, vector<8x1xf32>
    %36 = vector.shape_cast %35 : vector<8x1xf32> to vector<1x8x1xf32>
    %cst_11 = arith.constant dense<0.000000e+00> : vector<1xf32>
    %37 = vector.multi_reduction <add>, %36, %cst_11 [1, 2] : vector<1x8x1xf32> to vector<1xf32>
    %38 = vector.shape_cast %37 : vector<1xf32> to vector<1x1x1xf32>
    %39 = vector.extract %38[0, 0, 0] : f32 from vector<1x1x1xf32>
    %40 = vector.broadcast %39 : f32 to vector<1x1x128xf32>
    %c0_12 = arith.constant 0 : index
    %c0_13 = arith.constant 0 : index
    %c0_14 = arith.constant 0 : index
    %41 = vector.load %arg3[%c0_12, %c0_13, %c0_14] : memref<1x1x128xf32, #tpu.memory_space<vmem>>, vector<1x1x128xf32>
    tpu.vector_store %arg3[%c0_12, %c0_13, %c0_14], %40 {strides = array<i32>} : memref<1x1x128xf32, #tpu.memory_space<vmem>>, vector<1x1x128xf32>,
    return
  }
  func.func @transform_0(%arg0: i32) -> (i32, i32) {
    %c0_i32 = arith.constant 0 : i32
    %c0_i32_0 = arith.constant 0 : i32
    return %arg0, %c0_i32 : i32, i32
  }
  func.func @transform_1(%arg0: i32) -> (i32, i32) {
    %c0_i32 = arith.constant 0 : i32
    %c0_i32_0 = arith.constant 0 : i32
    return %arg0, %c0_i32 : i32, i32
  }
  func.func @transform_2(%arg0: i32) -> (i32, i32, i32) {
    %c0_i32 = arith.constant 0 : i32
    %c0_i32_0 = arith.constant 0 : i32
    %c0_i32_1 = arith.constant 0 : i32
    return %arg0, %c0_i32, %c0_i32_0 : i32, i32, i32
  }
}

</mosaic_0001>

<llo_original>
// kernel: tpu_custom_call.1
$region0: #{tpu_custom_call.1}
  #allocation0 [shape = 'u32[]', space=smem, size = 0x4, offset = 0x4, fixed_abs, tag = 'smem constant byte address 0x4 - core index']
  #allocation1 [shape = 'u32[144,128]{1,0:T(1,128)}', space=vmem, size = 0x12000, scoped, tag = 'internal scratch']
  %s0 = inlined_call_operand.vmem [shape: f32[8,32], index: 0, kind: input, shape index: {}]
  %s1 = inlined_call_operand.vmem [shape: s32[8,1], index: 1, kind: input, shape index: {}]
  %s2 = inlined_call_operand.hbm [shape: f32[1,1,128], index: 2, kind: output, shape index: {}]
  %s3 = sld [smem:[#allocation0]]
  $region18: #{tpu_custom_call.1} parent=0
    _
  %s5 = ssub.s32 1, %s3
  %s6 = scalar_select 0, %s5, %s3
  $region1: #{tpu_custom_call.1} parent=0
    #allocation2 [shape = 'u8[512]{0}', space=vmem, size = 0x400, scoped, tag = 'output window, operand 0, single buffered']
    #allocation3 [shape = 's32[1]{0}', space=sflag, size = 0x4, scoped, tag = 'scoped memory for tpu_custom_call.1']
    %7 = vsyncpa [#allocation3], 0
    // Predicated region
    $region2: #{tpu_custom_call.1} parent=1 // pred_check
      _
    $region3: #{tpu_custom_call.1} parent=1 // pred_check_branch
      %9 = sbr.rel (0) target = $region5
    $region4: #{tpu_custom_call.1} parent=1 // pred_region
      _
    $region5: #{tpu_custom_call.1} parent=1 // pred_fallthru
      _
    // Predicated region
    $region6: #{tpu_custom_call.1} parent=1 // pred_check
      _
    $region7: #{tpu_custom_call.1} parent=1 // pred_check_branch
      %11 = sbr.rel (0) target = $region9
    $region8: #{tpu_custom_call.1} parent=1 // pred_region
      _
    $region9: #{tpu_custom_call.1} parent=1 // pred_fallthru
      _
    %v12 = vld [vmem:[%s0] sm:$0xff]
    %v13 = vld [vmem:[%s1] sm:$0xff]
    %vm14 = vcmask 261120
    %v15 = vsel %vm14, %v12, -inf
    %16 = vmax.xlane.f32.xlu0 %v15
    %v17 = vpop.xlane.xlu0 %16
    %v18 = vsub.f32 %v12, %v17
    %v19 = vmul.f32 %v18, 1.442695
    %v20 = vpow.pop %v19
    %v21 = vsel %vm14, %v20, 0.0
    %22 = vadd.xlane.f32.xlu0 %v21
    %v23 = vpop.xlane.xlu0 %22
    %v24 = vlog2.pop %v23
    %v25 = vmul.f32 %v24, 0.6931472
    %v26 = vadd.f32 %v17, %v25
    %v27 = vlaneseq
    %v28 = vand.u32 %v27, 127
    %29 = vset.pattern.permute.xlu0 0
    %30 = vperm.xlu0 %29, %v13
    %v31 = vpop.permute.xlu0 %30
    %vm32 = vcmp.eq.s32.totalorder %v28, %v31
    %v33 = vsel %vm32, %v12, 0.0
    %v34 = vsel %vm14, %v33, 0.0
    %35 = vadd.xlane.f32.xlu0 %v34
    %v36 = vpop.xlane.xlu0 %35
    %v37 = vsub.f32 %v26, %v36
    %v38 = vsub.f32 0.0, %v37
    %v39 = vmul.f32 %v38, 1.442695
    %v40 = vpow.pop %v39
    %v41 = vsub.f32 1.0, %v40
    %v42 = vmul.f32 %v41, %v41
    %v43 = vmul.f32 %v37, %v42
    %v44 = vlaneseq
    %v45 = vshrl.u32 %v44, 7
    %s46 = smul.u32 0, 8
    %v47 = vstv %s46
    %v48 = vadd.s32 %v45, %v47
    %vm49 = vcmp.lt.s32.totalorder %v48, 8
    %v50 = vsel %vm49, %v43, 0.0
    %vm51 = vcmask 7168
    %v52 = vsel %vm51, %v50, 0.0
    %53 = vadd.xlane.f32.xlu0 %v52
    %v54 = vpop.xlane.xlu0 %53
    %v55 = vrot.slane %v54, 4
    %v56 = vadd.f32 %v54, %v55
    %v57 = vrot.slane %v56, 2
    %v58 = vadd.f32 %v56, %v57
    %v59 = vrot.slane %v58, 1
    %v60 = vadd.f32 %v58, %v59
    %s61 = vtos %v60
    %v62 = vstv %s61
    %63 = vst [vmem:[#allocation2] sm:$0x1] %v62
    // Predicated region
    $region10: #{tpu_custom_call.1} parent=1 // pred_check
      _
    $region11: #{tpu_custom_call.1} parent=1 // pred_check_branch
      %65 = sbr.rel (0) target = $region13
    $region12: #{tpu_custom_call.1} parent=1 // pred_region
      %s67 = ssub.s32 16, 16
      %68 = vsyncadd [#allocation3], %s67
      %s70 = sshll.u32 [#allocation2], 4
      %s71 = int_to_ptr.vmem [resolvable:$true] %s70
      %73 = dma.vmem_to_hbm [thread:$0]  %s71, 16, %s2, [#allocation3]
    $region13: #{tpu_custom_call.1} parent=1 // pred_fallthru
      _
    // Predicated region
    $region14: #{tpu_custom_call.1} parent=1 // pred_check
      _
    $region15: #{tpu_custom_call.1} parent=1 // pred_check_branch
      %75 = sbr.rel (0) target = $region17
    $region16: #{tpu_custom_call.1} parent=1 // pred_region
      %76 = dma.done [#allocation3], 16
    $region17: #{tpu_custom_call.1} parent=1 // pred_fallthru
      _
    %77 = vsyncpa [#allocation3], 1

</llo_original>
